<compile_context>
chip_gen: v7x
topology: tpu7x:2x2x1
jax: 0.10.0
libtpu: 0.0.40
codegen_flags: <defaults>
</compile_context>

<pallas_src>
import functools

import jax
import jax.numpy as jnp
from jax import lax
from jax.experimental import pallas as pl
from jax.experimental.pallas import tpu as pltpu


def _round_up(x, m):
    return (x + m - 1) // m * m


# ---------------------------------------------------------------------------
# Kernel 1: pointwise convs + masked sum-pool over the point axis.
# ---------------------------------------------------------------------------
def conv_pool_kernel(x_ref, w1_ref, b1_ref, w2_ref, b2_ref, o_ref, *, n_valid):
    # x_ref: (TB, C_in, TN) block of padded x (channel-major, points on lanes)
    # o_ref: (1, dim, TB) pooled-sum accumulator for this batch tile
    ni = pl.program_id(1)
    tb = x_ref.shape[0]
    tn = x_ref.shape[2]

    @pl.when(ni == 0)
    def _init():
        o_ref[...] = jnp.zeros_like(o_ref)

    # Mask out padded point columns (only the true N points are pooled).
    col = lax.broadcasted_iota(jnp.int32, (1, tn), 1) + ni * tn
    valid = col < n_valid

    w1 = w1_ref[...]        # (dim, C_in)
    b1 = b1_ref[...]        # (dim, 1)
    w2 = w2_ref[...]        # (dim, dim)
    b2 = b2_ref[...]        # (dim, 1)

    for t in range(tb):     # static unroll over batch elements in this tile
        xt = x_ref[t]                                              # (C_in, TN)
        h = jnp.dot(w1, xt, preferred_element_type=jnp.float32)
        h = jnp.maximum(h + b1, 0.0)                               # (dim, TN)
        h = jnp.dot(w2, h, preferred_element_type=jnp.float32) + b2
        h = jnp.where(valid, h, 0.0)                               # zero pads
        o_ref[0, :, t:t + 1] += jnp.sum(h, axis=1, keepdims=True)  # (dim, 1)


# ---------------------------------------------------------------------------
# Kernel 2: divide by n_points + the two Linear layers, whole batch at once.
# ---------------------------------------------------------------------------
def head_kernel(p_ref, invn_ref, w3t_ref, b3_ref, w4t_ref, b4_ref, o_ref):
    p = p_ref[...] * invn_ref[...]                                 # (Bp, dim)
    l = jnp.dot(p, w3t_ref[...], preferred_element_type=jnp.float32) + b3_ref[...]
    l = jnp.maximum(l, 0.0)
    o = jnp.dot(l, w4t_ref[...], preferred_element_type=jnp.float32) + b4_ref[...]
    o_ref[...] = o.astype(o_ref.dtype)


# ---------------------------------------------------------------------------
# Wrapper
# ---------------------------------------------------------------------------
def mean_encoder_forward(x, n_points, params):
    """x: (B, C_in, N) f32 (native PyTorch Conv1d layout).  n_points: (B,) int.
       Returns (B, output_channels) f32."""
    B, C_in, N = x.shape
    w1, b1, w2, b2, w3, b3, w4, b4 = params
    dim = w1.shape[0]
    out_ch = w4.shape[0]

    # ---- tile sizes: lane-aligned point tiles, sublane-aligned batch tiles --
    if N <= 512:
        n_pad = _round_up(N, 128)
        tn = n_pad
    else:
        tn = 512
        n_pad = _round_up(N, tn)
    if B <= 8:
        tb = B
        b_pad = B
    else:
        tb = 8
        b_pad = _round_up(B, 8)
    num_bt = b_pad // tb
    num_nt = n_pad // tn

    # ---- wrapper-side layout plumbing (cheap) -------------------------------
    x_p = jnp.pad(x, ((0, b_pad - B), (0, 0), (0, n_pad - N)))
    b1c = b1.reshape(dim, 1)
    b2c = b2.reshape(dim, 1)
    w3t = jnp.transpose(w3)                  # (dim, dim)
    w4t = jnp.transpose(w4)                  # (dim, out_ch)
    b3r = b3.reshape(1, dim)
    b4r = b4.reshape(1, out_ch)
    npf = jnp.pad(n_points.astype(jnp.float32), (0, b_pad - B),
                  constant_values=1.0)
    invn = (1.0 / npf).reshape(b_pad, 1)

    full = lambda shape: pl.BlockSpec(shape, lambda bi, ni: (0,) * len(shape))

    flops = 2 * b_pad * n_pad * dim * (C_in + dim)
    bytes_accessed = 4 * (x_p.size + w1.size + w2.size + 2 * dim
                          + num_bt * dim * tb)

    pooled3 = pl.pallas_call(
        functools.partial(conv_pool_kernel, n_valid=N),
        out_shape=jax.ShapeDtypeStruct((num_bt, dim, tb), jnp.float32),
        grid_spec=pltpu.PrefetchScalarGridSpec(
            num_scalar_prefetch=0,
            grid=(num_bt, num_nt),
            in_specs=[
                pl.BlockSpec((tb, C_in, tn), lambda bi, ni: (bi, 0, ni)),  # x
                full((dim, C_in)), full((dim, 1)),                         # conv1
                full((dim, dim)), full((dim, 1)),                          # conv2
            ],
            out_specs=pl.BlockSpec((1, dim, tb), lambda bi, ni: (bi, 0, 0)),
        ),
        compiler_params=pltpu.CompilerParams(
            dimension_semantics=("parallel", "arbitrary"),
            vmem_limit_bytes=32 * 1024 * 1024),
        cost_estimate=pl.CostEstimate(flops=flops, transcendentals=0,
                                      bytes_accessed=bytes_accessed),
    )(x_p, w1, b1c, w2, b2c)

    # (num_bt, dim, tb) -> (b_pad, dim): layout plumbing outside the kernel so
    # the head sees a lane-dense (batch, dim) slab.
    pooled = jnp.transpose(pooled3, (0, 2, 1)).reshape(b_pad, dim)

    out = pl.pallas_call(
        head_kernel,
        out_shape=jax.ShapeDtypeStruct((b_pad, out_ch), jnp.float32),
        grid_spec=pltpu.PrefetchScalarGridSpec(
            num_scalar_prefetch=0,
            grid=(1,),
            in_specs=[
                pl.BlockSpec((b_pad, dim), lambda i: (0, 0)),
                pl.BlockSpec((b_pad, 1), lambda i: (0, 0)),
                pl.BlockSpec((dim, dim), lambda i: (0, 0)),
                pl.BlockSpec((1, dim), lambda i: (0, 0)),
                pl.BlockSpec((dim, out_ch), lambda i: (0, 0)),
                pl.BlockSpec((1, out_ch), lambda i: (0, 0)),
            ],
            out_specs=pl.BlockSpec((b_pad, out_ch), lambda i: (0, 0)),
        ),
        compiler_params=pltpu.CompilerParams(
            dimension_semantics=("arbitrary",)),
    )(pooled, invn, w3t, b3r, w4t, b4r)

    return out[:B]


# ---------------------------------------------------------------------------
# Parameters / reference / test
# ---------------------------------------------------------------------------
def init_params(key, input_channels, output_channels, dim):
    """Synthetic parameters matching the PyTorch shapes:
       Conv1d(C_in, dim, 1): W (dim, C_in), b (dim,)   [k=1 kernel dim squeezed]
       Conv1d(dim,  dim, 1): W (dim, dim),  b (dim,)
       Linear(dim, dim):     W (dim, dim),  b (dim,)
       Linear(dim, out):     W (out, dim),  b (out,)"""
    ks = jax.random.split(key, 8)
    s = 0.1
    w1 = s * jax.random.normal(ks[0], (dim, input_channels), jnp.float32)
    b1 = s * jax.random.normal(ks[1], (dim,), jnp.float32)
    w2 = s * jax.random.normal(ks[2], (dim, dim), jnp.float32)
    b2 = s * jax.random.normal(ks[3], (dim,), jnp.float32)
    w3 = s * jax.random.normal(ks[4], (dim, dim), jnp.float32)
    b3 = s * jax.random.normal(ks[5], (dim,), jnp.float32)
    w4 = s * jax.random.normal(ks[6], (output_channels, dim), jnp.float32)
    b4 = s * jax.random.normal(ks[7], (output_channels,), jnp.float32)
    return (w1, b1, w2, b2, w3, b3, w4, b4)


def mean_encoder_reference(x, n_points, params):
    """Plain-JAX reference mirroring the PyTorch forward (x is (B, C_in, N))."""
    w1, b1, w2, b2, w3, b3, w4, b4 = params
    h = jnp.einsum('dc,bcn->bdn', w1, x) + b1[None, :, None]
    h = jnp.maximum(h, 0.0)
    h = jnp.einsum('ed,bdn->ben', w2, h) + b2[None, :, None]
    pooled = jnp.sum(h, axis=2) / n_points.astype(jnp.float32)[:, None]
    l = jnp.maximum(pooled @ w3.T + b3, 0.0)
    return l @ w4.T + b4


if __name__ == "__main__":
    B, C_in, N = 2, 4, 16
    dim, out_ch = 32, 8

    key = jax.random.PRNGKey(0)
    k_x, k_n, k_p = jax.random.split(key, 3)

    # PyTorch Conv1d layout: (B, C_in, N)
    x = jax.random.normal(k_x, (B, C_in, N), jnp.float32)
    n_points = jax.random.randint(k_n, (B,), 1, N + 1, dtype=jnp.int32)
    params = init_params(k_p, C_in, out_ch, dim)

    fwd = jax.jit(mean_encoder_forward)
    out = jax.block_until_ready(fwd(x, n_points, params))

    ref = mean_encoder_reference(x, n_points, params)
    assert out.shape == (B, out_ch)
    assert jnp.allclose(out, ref, atol=2e-5, rtol=2e-5), (out, ref)

    print("KERNEL_OK")
</pallas_src>

<mosaic_0001>
module attributes {stable_mosaic.version = 11 : i64} {
  func.func @conv_pool_kernel(%arg0: i32, %arg1: i32, %arg2: memref<2x4x128xf32, #tpu.memory_space<vmem>>, %arg3: memref<32x4xf32, #tpu.memory_space<vmem>>, %arg4: memref<32x1xf32, #tpu.memory_space<vmem>>, %arg5: memref<32x32xf32, #tpu.memory_space<vmem>>, %arg6: memref<32x1xf32, #tpu.memory_space<vmem>>, %arg7: memref<1x32x2xf32, #tpu.memory_space<vmem>>) attributes {dimension_semantics = [#tpu.dimension_semantics<parallel>, #tpu.dimension_semantics<arbitrary>], iteration_bounds = array<i64: 1, 1>, scalar_prefetch = 0 : i64, scratch_operands = 0 : i64, tpu.core_type = #tpu.core_type<tc>, window_params = [{transform_indices = @transform_0, window_bounds = array<i64: 2, 4, 128>}, {pipeline_mode = #tpu.pipeline_mode<synchronous>, transform_indices = @transform_1, window_bounds = array<i64: 32, 4>}, {pipeline_mode = #tpu.pipeline_mode<synchronous>, transform_indices = @transform_2, window_bounds = array<i64: 32, 1>}, {pipeline_mode = #tpu.pipeline_mode<synchronous>, transform_indices = @transform_3, window_bounds = array<i64: 32, 32>}, {pipeline_mode = #tpu.pipeline_mode<synchronous>, transform_indices = @transform_4, window_bounds = array<i64: 32, 1>}, {transform_indices = @transform_5, window_bounds = array<i64: 1, 32, 2>}]} {
    %c0_i32 = arith.constant 0 : i32
    %0 = arith.cmpi eq, %arg1, %c0_i32 : i32
    %1 = arith.extui %0 : i1 to i32
    %c0_i32_0 = arith.constant 0 : i32
    %2 = arith.cmpi ne, %1, %c0_i32_0 : i32
    scf.if %2 {
      %cst_34 = arith.constant 0.000000e+00 : f32
      %57 = vector.broadcast %cst_34 : f32 to vector<1x32x2xf32>
      %c0_35 = arith.constant 0 : index
      %c0_36 = arith.constant 0 : index
      %c0_37 = arith.constant 0 : index
      %58 = vector.load %arg7[%c0_35, %c0_36, %c0_37] : memref<1x32x2xf32, #tpu.memory_space<vmem>>, vector<1x32x2xf32>
      tpu.vector_store %arg7[%c0_35, %c0_36, %c0_37], %57 {strides = array<i32>} : memref<1x32x2xf32, #tpu.memory_space<vmem>>, vector<1x32x2xf32>,
    } else {
    }
    %3 = tpu.iota {dimensions = array<i32: 1>} : vector<1x128xi32>
    %c128_i32 = arith.constant 128 : i32
    %4 = arith.muli %arg1, %c128_i32 : i32
    %5 = vector.broadcast %4 : i32 to vector<1x128xi32>
    %6 = arith.addi %3, %5 : vector<1x128xi32>
    %c16_i32 = arith.constant 16 : i32
    %7 = vector.broadcast %c16_i32 : i32 to vector<1x128xi32>
    %8 = arith.cmpi slt, %6, %7 : vector<1x128xi32>
    %c0 = arith.constant 0 : index
    %c0_1 = arith.constant 0 : index
    %9 = vector.load %arg3[%c0, %c0_1] : memref<32x4xf32, #tpu.memory_space<vmem>>, vector<32x4xf32>
    %c0_2 = arith.constant 0 : index
    %c0_3 = arith.constant 0 : index
    %10 = vector.load %arg4[%c0_2, %c0_3] : memref<32x1xf32, #tpu.memory_space<vmem>>, vector<32x1xf32>
    %c0_4 = arith.constant 0 : index
    %c0_5 = arith.constant 0 : index
    %11 = vector.load %arg5[%c0_4, %c0_5] : memref<32x32xf32, #tpu.memory_space<vmem>>, vector<32x32xf32>
    %c0_6 = arith.constant 0 : index
    %c0_7 = arith.constant 0 : index
    %12 = vector.load %arg6[%c0_6, %c0_7] : memref<32x1xf32, #tpu.memory_space<vmem>>, vector<32x1xf32>
    %c0_8 = arith.constant 0 : index
    %c0_9 = arith.constant 0 : index
    %c0_10 = arith.constant 0 : index
    %13 = vector.load %arg2[%c0_8, %c0_9, %c0_10] : memref<2x4x128xf32, #tpu.memory_space<vmem>>, vector<1x4x128xf32>
    %14 = vector.shape_cast %13 : vector<1x4x128xf32> to vector<4x128xf32>
    %cst = arith.constant dense<0.000000e+00> : vector<32x128xf32>
    %15 = tpu.matmul %9, %14, %cst {dimension_numbers = #tpu.dot_dimension_numbers<[1], [0], [0], [1], [0, 0, 1, 1], [], []>} : vector<32x4xf32>, vector<4x128xf32>, vector<32x128xf32> -> vector<32x128xf32>
    %16 = vector.broadcast %10 : vector<32x1xf32> to vector<32x128xf32>
    %17 = arith.addf %15, %16 : vector<32x128xf32>
    %cst_11 = arith.constant 0.000000e+00 : f32
    %18 = vector.broadcast %cst_11 : f32 to vector<32x128xf32>
    %19 = arith.maximumf %17, %18 : vector<32x128xf32>
    %cst_12 = arith.constant dense<0.000000e+00> : vector<32x128xf32>
    %20 = tpu.matmul %11, %19, %cst_12 {dimension_numbers = #tpu.dot_dimension_numbers<[1], [0], [0], [1], [0, 0, 1, 1], [], []>} : vector<32x32xf32>, vector<32x128xf32>, vector<32x128xf32> -> vector<32x128xf32>
    %21 = vector.broadcast %12 : vector<32x1xf32> to vector<32x128xf32>
    %22 = arith.addf %20, %21 : vector<32x128xf32>
    %cst_13 = arith.constant 0.000000e+00 : f32
    %23 = vector.shape_cast %8 : vector<1x128xi1> to vector<1x128xi1>
    %24 = vector.broadcast %23 : vector<1x128xi1> to vector<32x128xi1>
    %25 = vector.broadcast %cst_13 : f32 to vector<32x128xf32>
    %26 = arith.select %24, %22, %25 : vector<32x128xi1>, vector<32x128xf32>
    %c0_14 = arith.constant 0 : index
    %c0_15 = arith.constant 0 : index
    %c0_16 = arith.constant 0 : index
    %27 = vector.load %arg7[%c0_14, %c0_15, %c0_16] : memref<1x32x2xf32, #tpu.memory_space<vmem>>, vector<1x32x1xf32>
    %28 = vector.shape_cast %27 : vector<1x32x1xf32> to vector<32x1xf32>
    %cst_17 = arith.constant dense<0.000000e+00> : vector<32xf32>
    %29 = vector.multi_reduction <add>, %26, %cst_17 [1] : vector<32x128xf32> to vector<32xf32>
    %30 = vector.shape_cast %29 : vector<32xf32> to vector<32x1xf32>
    %31 = arith.addf %28, %30 : vector<32x1xf32>
    %c0_18 = arith.constant 0 : index
    %c0_19 = arith.constant 0 : index
    %c0_20 = arith.constant 0 : index
    %32 = vector.load %arg7[%c0_18, %c0_19, %c0_20] : memref<1x32x2xf32, #tpu.memory_space<vmem>>, vector<1x32x1xf32>
    %33 = vector.shape_cast %32 : vector<1x32x1xf32> to vector<32x1xf32>
    %34 = vector.shape_cast %31 : vector<32x1xf32> to vector<1x32x1xf32>
    tpu.vector_store %arg7[%c0_18, %c0_19, %c0_20], %34 {strides = array<i32>} : memref<1x32x2xf32, #tpu.memory_space<vmem>>, vector<1x32x1xf32>,
    %c1 = arith.constant 1 : index
    %c0_21 = arith.constant 0 : index
    %c0_22 = arith.constant 0 : index
    %35 = vector.load %arg2[%c1, %c0_21, %c0_22] : memref<2x4x128xf32, #tpu.memory_space<vmem>>, vector<1x4x128xf32>
    %36 = vector.shape_cast %35 : vector<1x4x128xf32> to vector<4x128xf32>
    %cst_23 = arith.constant dense<0.000000e+00> : vector<32x128xf32>
    %37 = tpu.matmul %9, %36, %cst_23 {dimension_numbers = #tpu.dot_dimension_numbers<[1], [0], [0], [1], [0, 0, 1, 1], [], []>} : vector<32x4xf32>, vector<4x128xf32>, vector<32x128xf32> -> vector<32x128xf32>
    %38 = vector.broadcast %10 : vector<32x1xf32> to vector<32x128xf32>
    %39 = arith.addf %37, %38 : vector<32x128xf32>
    %cst_24 = arith.constant 0.000000e+00 : f32
    %40 = vector.broadcast %cst_24 : f32 to vector<32x128xf32>
    %41 = arith.maximumf %39, %40 : vector<32x128xf32>
    %cst_25 = arith.constant dense<0.000000e+00> : vector<32x128xf32>
    %42 = tpu.matmul %11, %41, %cst_25 {dimension_numbers = #tpu.dot_dimension_numbers<[1], [0], [0], [1], [0, 0, 1, 1], [], []>} : vector<32x32xf32>, vector<32x128xf32>, vector<32x128xf32> -> vector<32x128xf32>
    %43 = vector.broadcast %12 : vector<32x1xf32> to vector<32x128xf32>
    %44 = arith.addf %42, %43 : vector<32x128xf32>
    %cst_26 = arith.constant 0.000000e+00 : f32
    %45 = vector.shape_cast %8 : vector<1x128xi1> to vector<1x128xi1>
    %46 = vector.broadcast %45 : vector<1x128xi1> to vector<32x128xi1>
    %47 = vector.broadcast %cst_26 : f32 to vector<32x128xf32>
    %48 = arith.select %46, %44, %47 : vector<32x128xi1>, vector<32x128xf32>
    %c0_27 = arith.constant 0 : index
    %c0_28 = arith.constant 0 : index
    %c1_29 = arith.constant 1 : index
    %49 = vector.load %arg7[%c0_27, %c0_28, %c1_29] : memref<1x32x2xf32, #tpu.memory_space<vmem>>, vector<1x32x1xf32>
    %50 = vector.shape_cast %49 : vector<1x32x1xf32> to vector<32x1xf32>
    %cst_30 = arith.constant dense<0.000000e+00> : vector<32xf32>
    %51 = vector.multi_reduction <add>, %48, %cst_30 [1] : vector<32x128xf32> to vector<32xf32>
    %52 = vector.shape_cast %51 : vector<32xf32> to vector<32x1xf32>
    %53 = arith.addf %50, %52 : vector<32x1xf32>
    %c0_31 = arith.constant 0 : index
    %c0_32 = arith.constant 0 : index
    %c1_33 = arith.constant 1 : index
    %54 = vector.load %arg7[%c0_31, %c0_32, %c1_33] : memref<1x32x2xf32, #tpu.memory_space<vmem>>, vector<1x32x1xf32>
    %55 = vector.shape_cast %54 : vector<1x32x1xf32> to vector<32x1xf32>
    %56 = vector.shape_cast %53 : vector<32x1xf32> to vector<1x32x1xf32>
    tpu.vector_store %arg7[%c0_31, %c0_32, %c1_33], %56 {strides = array<i32>} : memref<1x32x2xf32, #tpu.memory_space<vmem>>, vector<1x32x1xf32>,
    return
  }
  func.func @transform_0(%arg0: i32, %arg1: i32) -> (i32, i32, i32) {
    %c0_i32 = arith.constant 0 : i32
    %c0_i32_0 = arith.constant 0 : i32
    return %arg0, %c0_i32, %arg1 : i32, i32, i32
  }
  func.func @transform_1(%arg0: i32, %arg1: i32) -> (i32, i32) {
    %c0_i32 = arith.constant 0 : i32
    %c0_i32_0 = arith.constant 0 : i32
    %c0_i32_1 = arith.constant 0 : i32
    return %c0_i32, %c0_i32_0 : i32, i32
  }
  func.func @transform_2(%arg0: i32, %arg1: i32) -> (i32, i32) {
    %c0_i32 = arith.constant 0 : i32
    %c0_i32_0 = arith.constant 0 : i32
    %c0_i32_1 = arith.constant 0 : i32
    return %c0_i32, %c0_i32_0 : i32, i32
  }
  func.func @transform_3(%arg0: i32, %arg1: i32) -> (i32, i32) {
    %c0_i32 = arith.constant 0 : i32
    %c0_i32_0 = arith.constant 0 : i32
    %c0_i32_1 = arith.constant 0 : i32
    return %c0_i32, %c0_i32_0 : i32, i32
  }
  func.func @transform_4(%arg0: i32, %arg1: i32) -> (i32, i32) {
    %c0_i32 = arith.constant 0 : i32
    %c0_i32_0 = arith.constant 0 : i32
    %c0_i32_1 = arith.constant 0 : i32
    return %c0_i32, %c0_i32_0 : i32, i32
  }
  func.func @transform_5(%arg0: i32, %arg1: i32) -> (i32, i32, i32) {
    %c0_i32 = arith.constant 0 : i32
    %c0_i32_0 = arith.constant 0 : i32
    %c0_i32_1 = arith.constant 0 : i32
    return %arg0, %c0_i32, %c0_i32_0 : i32, i32, i32
  }
}

module attributes {stable_mosaic.version = 11 : i64} {
  func.func @head_kernel(%arg0: i32, %arg1: memref<2x32xf32, #tpu.memory_space<vmem>>, %arg2: memref<2x1xf32, #tpu.memory_space<vmem>>, %arg3: memref<32x32xf32, #tpu.memory_space<vmem>>, %arg4: memref<1x32xf32, #tpu.memory_space<vmem>>, %arg5: memref<32x8xf32, #tpu.memory_space<vmem>>, %arg6: memref<1x8xf32, #tpu.memory_space<vmem>>, %arg7: memref<2x8xf32, #tpu.memory_space<vmem>>) attributes {dimension_semantics = [#tpu.dimension_semantics<arbitrary>], iteration_bounds = array<i64: 1>, scalar_prefetch = 0 : i64, scratch_operands = 0 : i64, tpu.core_type = #tpu.core_type<tc>, window_params = [{pipeline_mode = #tpu.pipeline_mode<synchronous>, transform_indices = @transform_0, window_bounds = array<i64: 2, 32>}, {pipeline_mode = #tpu.pipeline_mode<synchronous>, transform_indices = @transform_1, window_bounds = array<i64: 2, 1>}, {pipeline_mode = #tpu.pipeline_mode<synchronous>, transform_indices = @transform_2, window_bounds = array<i64: 32, 32>}, {pipeline_mode = #tpu.pipeline_mode<synchronous>, transform_indices = @transform_3, window_bounds = array<i64: 1, 32>}, {pipeline_mode = #tpu.pipeline_mode<synchronous>, transform_indices = @transform_4, window_bounds = array<i64: 32, 8>}, {pipeline_mode = #tpu.pipeline_mode<synchronous>, transform_indices = @transform_5, window_bounds = array<i64: 1, 8>}, {pipeline_mode = #tpu.pipeline_mode<synchronous>, transform_indices = @transform_6, window_bounds = array<i64: 2, 8>}]} {
    %c0 = arith.constant 0 : index
    %c0_0 = arith.constant 0 : index
    %0 = vector.load %arg1[%c0, %c0_0] : memref<2x32xf32, #tpu.memory_space<vmem>>, vector<2x32xf32>
    %c0_1 = arith.constant 0 : index
    %c0_2 = arith.constant 0 : index
    %1 = vector.load %arg2[%c0_1, %c0_2] : memref<2x1xf32, #tpu.memory_space<vmem>>, vector<2x1xf32>
    %2 = vector.broadcast %1 : vector<2x1xf32> to vector<2x32xf32>
    %3 = arith.mulf %0, %2 : vector<2x32xf32>
    %c0_3 = arith.constant 0 : index
    %c0_4 = arith.constant 0 : index
    %4 = vector.load %arg3[%c0_3, %c0_4] : memref<32x32xf32, #tpu.memory_space<vmem>>, vector<32x32xf32>
    %cst = arith.constant dense<0.000000e+00> : vector<2x32xf32>
    %5 = tpu.matmul %3, %4, %cst {dimension_numbers = #tpu.dot_dimension_numbers<[1], [0], [0], [1], [0, 0, 1, 1], [], []>} : vector<2x32xf32>, vector<32x32xf32>, vector<2x32xf32> -> vector<2x32xf32>
    %c0_5 = arith.constant 0 : index
    %c0_6 = arith.constant 0 : index
    %6 = vector.load %arg4[%c0_5, %c0_6] : memref<1x32xf32, #tpu.memory_space<vmem>>, vector<1x32xf32>
    %7 = vector.broadcast %6 : vector<1x32xf32> to vector<2x32xf32>
    %8 = arith.addf %5, %7 : vector<2x32xf32>
    %cst_7 = arith.constant 0.000000e+00 : f32
    %9 = vector.broadcast %cst_7 : f32 to vector<2x32xf32>
    %10 = arith.maximumf %8, %9 : vector<2x32xf32>
    %c0_8 = arith.constant 0 : index
    %c0_9 = arith.constant 0 : index
    %11 = vector.load %arg5[%c0_8, %c0_9] : memref<32x8xf32, #tpu.memory_space<vmem>>, vector<32x8xf32>
    %cst_10 = arith.constant dense<0.000000e+00> : vector<2x8xf32>
    %12 = tpu.matmul %10, %11, %cst_10 {dimension_numbers = #tpu.dot_dimension_numbers<[1], [0], [0], [1], [0, 0, 1, 1], [], []>} : vector<2x32xf32>, vector<32x8xf32>, vector<2x8xf32> -> vector<2x8xf32>
    %c0_11 = arith.constant 0 : index
    %c0_12 = arith.constant 0 : index
    %13 = vector.load %arg6[%c0_11, %c0_12] : memref<1x8xf32, #tpu.memory_space<vmem>>, vector<1x8xf32>
    %14 = vector.broadcast %13 : vector<1x8xf32> to vector<2x8xf32>
    %15 = arith.addf %12, %14 : vector<2x8xf32>
    %c0_13 = arith.constant 0 : index
    %c0_14 = arith.constant 0 : index
    %16 = vector.load %arg7[%c0_13, %c0_14] : memref<2x8xf32, #tpu.memory_space<vmem>>, vector<2x8xf32>
    tpu.vector_store %arg7[%c0_13, %c0_14], %15 {strides = array<i32>} : memref<2x8xf32, #tpu.memory_space<vmem>>, vector<2x8xf32>,
    return
  }
  func.func @transform_0(%arg0: i32) -> (i32, i32) {
    %c0_i32 = arith.constant 0 : i32
    %c0_i32_0 = arith.constant 0 : i32
    %c0_i32_1 = arith.constant 0 : i32
    return %c0_i32, %c0_i32_0 : i32, i32
  }
  func.func @transform_1(%arg0: i32) -> (i32, i32) {
    %c0_i32 = arith.constant 0 : i32
    %c0_i32_0 = arith.constant 0 : i32
    %c0_i32_1 = arith.constant 0 : i32
    return %c0_i32, %c0_i32_0 : i32, i32
  }
  func.func @transform_2(%arg0: i32) -> (i32, i32) {
    %c0_i32 = arith.constant 0 : i32
    %c0_i32_0 = arith.constant 0 : i32
    %c0_i32_1 = arith.constant 0 : i32
    return %c0_i32, %c0_i32_0 : i32, i32
  }
  func.func @transform_3(%arg0: i32) -> (i32, i32) {
    %c0_i32 = arith.constant 0 : i32
    %c0_i32_0 = arith.constant 0 : i32
    %c0_i32_1 = arith.constant 0 : i32
    return %c0_i32, %c0_i32_0 : i32, i32
  }
  func.func @transform_4(%arg0: i32) -> (i32, i32) {
    %c0_i32 = arith.constant 0 : i32
    %c0_i32_0 = arith.constant 0 : i32
    %c0_i32_1 = arith.constant 0 : i32
    return %c0_i32, %c0_i32_0 : i32, i32
  }
  func.func @transform_5(%arg0: i32) -> (i32, i32) {
    %c0_i32 = arith.constant 0 : i32
    %c0_i32_0 = arith.constant 0 : i32
    %c0_i32_1 = arith.constant 0 : i32
    return %c0_i32, %c0_i32_0 : i32, i32
  }
  func.func @transform_6(%arg0: i32) -> (i32, i32) {
    %c0_i32 = arith.constant 0 : i32
    %c0_i32_0 = arith.constant 0 : i32
    %c0_i32_1 = arith.constant 0 : i32
    return %c0_i32, %c0_i32_0 : i32, i32
  }
}

</mosaic_0001>

<llo_original>
// kernel: mean_encoder_forward.3
$region0: #{mean_encoder_forward.3}
  #allocation0 [shape = 'u32[]', space=smem, size = 0x4, offset = 0x4, fixed_abs, tag = 'smem constant byte address 0x4 - core index']
  #allocation1 [shape = 'u32[144,128]{1,0:T(1,128)}', space=vmem, size = 0x12000, scoped, tag = 'internal scratch']
  %s0 = inlined_call_operand.vmem [shape: f32[2,32], index: 0, kind: input, shape index: {}]
  %s1 = inlined_call_operand.vmem [shape: f32[2,1], index: 1, kind: input, shape index: {}]
  %s2 = inlined_call_operand.vmem [shape: f32[32,32], index: 2, kind: input, shape index: {}]
  %s3 = inlined_call_operand.vmem [shape: f32[1,32], index: 3, kind: input, shape index: {}]
  %s4 = inlined_call_operand.vmem [shape: f32[32,8], index: 4, kind: input, shape index: {}]
  %s5 = inlined_call_operand.vmem [shape: f32[1,8], index: 5, kind: input, shape index: {}]
  %s6 = inlined_call_operand.hbm [shape: f32[2,8], index: 6, kind: output, shape index: {}]
  %s7 = sld [smem:[#allocation0]]
  $region34: #{mean_encoder_forward.3} parent=0
    _
  %s9 = ssub.s32 1, %s7
  %s10 = scalar_select 0, %s9, %s7
  $region1: #{mean_encoder_forward.3} parent=0
    #allocation2 [shape = 'u8[1024]{0}', space=vmem, size = 0x400, scoped, tag = 'output window, operand 0, single buffered']
    #allocation3 [shape = 's32[1]{0}', space=sflag, size = 0x4, scoped, tag = 'scoped memory for mean_encoder_forward.3']
    %11 = vsyncpa [#allocation3], 0
    // Predicated region
    $region2: #{mean_encoder_forward.3} parent=1 // pred_check
      _
    $region3: #{mean_encoder_forward.3} parent=1 // pred_check_branch
      %13 = sbr.rel (0) target = $region5
    $region4: #{mean_encoder_forward.3} parent=1 // pred_region
      _
    $region5: #{mean_encoder_forward.3} parent=1 // pred_fallthru
      _
    // Predicated region
    $region6: #{mean_encoder_forward.3} parent=1 // pred_check
      _
    $region7: #{mean_encoder_forward.3} parent=1 // pred_check_branch
      %15 = sbr.rel (0) target = $region9
    $region8: #{mean_encoder_forward.3} parent=1 // pred_region
      _
    $region9: #{mean_encoder_forward.3} parent=1 // pred_fallthru
      _
    // Predicated region
    $region10: #{mean_encoder_forward.3} parent=1 // pred_check
      _
    $region11: #{mean_encoder_forward.3} parent=1 // pred_check_branch
      %17 = sbr.rel (0) target = $region13
    $region12: #{mean_encoder_forward.3} parent=1 // pred_region
      _
    $region13: #{mean_encoder_forward.3} parent=1 // pred_fallthru
      _
    // Predicated region
    $region14: #{mean_encoder_forward.3} parent=1 // pred_check
      _
    $region15: #{mean_encoder_forward.3} parent=1 // pred_check_branch
      %19 = sbr.rel (0) target = $region17
    $region16: #{mean_encoder_forward.3} parent=1 // pred_region
      _
    $region17: #{mean_encoder_forward.3} parent=1 // pred_fallthru
      _
    // Predicated region
    $region18: #{mean_encoder_forward.3} parent=1 // pred_check
      _
    $region19: #{mean_encoder_forward.3} parent=1 // pred_check_branch
      %21 = sbr.rel (0) target = $region21
    $region20: #{mean_encoder_forward.3} parent=1 // pred_region
      _
    $region21: #{mean_encoder_forward.3} parent=1 // pred_fallthru
      _
    // Predicated region
    $region22: #{mean_encoder_forward.3} parent=1 // pred_check
      _
    $region23: #{mean_encoder_forward.3} parent=1 // pred_check_branch
      %23 = sbr.rel (0) target = $region25
    $region24: #{mean_encoder_forward.3} parent=1 // pred_region
      _
    $region25: #{mean_encoder_forward.3} parent=1 // pred_fallthru
      _
    %v24 = vld [vmem:[%s0] sm:$0x3]
    %v25 = vld [vmem:[%s1] sm:$0x3]
    %27 = vset.pattern.permute.xlu0 0
    %28 = vperm.xlu0 %27, %v25
    %v29 = vpop.permute.xlu0 %28
    %v31 = vmul.f32 %v24, %v29
    %v32 = vld [vmem:[%s2] sm:$0xff]
    %v33 = vld [vmem:[%s2 + $0x8] sm:$0xff]
    %v34 = vld [vmem:[%s2 + $0x10] sm:$0xff]
    %v35 = vld [vmem:[%s2 + $0x18] sm:$0xff]
    %v36 = vld [vmem:[%s3] sm:$0x1]
    %v38 = vlaneseq
    %v39 = vshrl.u32 %v38, 7
    %v40 = vsub.s32 0, %v39
    %v41 = vrot.slane %v36, %v40
    %vm43 = vcmask 261120
    %v45 = vsel %vm43, %v31, 0
    %47 = vmatprep.subr.mxu0 0.0
    %48 = vmatpush1.msra.mxu0 %v32
    %49 = vmatprep.subr.mxu0 0.0
    %50 = vmatpush1.msra.mxu0 %v33
    %51 = vmatprep.subr.mxu0 0.0
    %52 = vmatpush1.msra.mxu0 %v34
    %53 = vmatprep.subr.mxu0 0.0
    %54 = vmatpush1.msra.mxu0 %v35
    %55 = vmatprep.subr.mxu0 0.0
    %56 = vmatpush1.msra.mxu0 0.0
    %57 = vmatprep.subr.mxu0 0.0
    %58 = vmatpush1.msra.mxu0 0.0
    %59 = vmatprep.subr.mxu0 0.0
    %60 = vmatpush1.msra.mxu0 0.0
    %61 = vmatprep.subr.mxu0 0.0
    %62 = vmatpush1.msra.mxu0 0.0
    %63 = vmatprep.subr.mxu0 0.0
    %64 = vmatpush1.msra.mxu0 0.0
    %65 = vmatprep.subr.mxu0 0.0
    %66 = vmatpush1.msra.mxu0 0.0
    %67 = vmatprep.subr.mxu0 0.0
    %68 = vmatpush1.msra.mxu0 0.0
    %69 = vmatprep.subr.mxu0 0.0
    %70 = vmatpush1.msra.mxu0 0.0
    %71 = vmatprep.subr.mxu0 0.0
    %72 = vmatpush1.msra.mxu0 0.0
    %73 = vmatprep.subr.mxu0 0.0
    %74 = vmatpush1.msra.mxu0 0.0
    %75 = vmatprep.subr.mxu0 0.0
    %76 = vmatpush1.msra.mxu0 0.0
    %77 = vmatprep.subr.mxu0 0.0
    %78 = vmatpush1.msra.mxu0 0.0
    %79 = vmatprep.subr.mxu0 0.0
    %80 = vmatpush1.msra.mxu0 0.0
    %81 = vmatprep.subr.mxu0 0.0
    %82 = vmatpush1.msra.mxu0 0.0
    %83 = vmatprep.subr.mxu0 0.0
    %84 = vmatpush1.msra.mxu0 0.0
    %85 = vmatprep.subr.mxu0 0.0
    %86 = vmatpush1.msra.mxu0 0.0
    %87 = vmatprep.subr.mxu0 0.0
    %88 = vmatpush1.msra.mxu0 0.0
    %89 = vmatprep.subr.mxu0 0.0
    %90 = vmatpush1.msra.mxu0 0.0
    %91 = vmatprep.subr.mxu0 0.0
    %92 = vmatpush1.msra.mxu0 0.0
    %93 = vmatprep.subr.mxu0 0.0
    %94 = vmatpush1.msra.mxu0 0.0
    %95 = vmatprep.subr.mxu0 0.0
    %96 = vmatpush1.msra.mxu0 0.0
    %97 = vmatprep.subr.mxu0 0.0
    %98 = vmatpush1.msra.mxu0 0.0
    %99 = vmatprep.subr.mxu0 0.0
    %100 = vmatpush1.msra.mxu0 0.0
    %101 = vmatprep.subr.mxu0 0.0
    %102 = vmatpush1.msra.mxu0 0.0
    %103 = vmatprep.subr.mxu0 0.0
    %104 = vmatpush1.msra.mxu0 0.0
    %105 = vmatprep.subr.mxu0 0.0
    %106 = vmatpush1.msra.mxu0 0.0
    %107 = vmatprep.subr.mxu0 0.0
    %108 = vmatpush1.msra.mxu0 0.0
    %109 = vmatprep.subr.mxu0 0.0
    %110 = vmatpush1.msra.mxu0 0.0
    %111 = vmatprep.mubr.f32.mxu0 0.0
    %112 = vmatmul.mubr.f32.gmra.mrb[0].mxu0 %v45
    %v113 = vpop.f32.mrb[0].mxu0
    %v114 = vadd.f32 %v41, %v113
    %v115 = vpop.f32.mrb[0].mxu0
    %116 = vdwg.mxu0
    %v117 = vmax.f32 %v114, 0.0
    %v118 = vld [vmem:[%s4] sm:$0xff]
    %v119 = vld [vmem:[%s4 + $0x8] sm:$0xff]
    %v120 = vld [vmem:[%s4 + $0x10] sm:$0xff]
    %v121 = vld [vmem:[%s4 + $0x18] sm:$0xff]
    %v122 = vld [vmem:[%s5] sm:$0x1]
    %v124 = vlaneseq
    %v125 = vshrl.u32 %v124, 7
    %v126 = vsub.s32 0, %v125
    %v127 = vrot.slane %v122, %v126
    %v130 = vsel %vm43, %v117, 0
    %132 = vmatprep.subr.mxu0 0.0
    %133 = vmatpush1.msra.mxu0 %v118
    %134 = vmatprep.subr.mxu0 0.0
    %135 = vmatpush1.msra.mxu0 %v119
    %136 = vmatprep.subr.mxu0 0.0
    %137 = vmatpush1.msra.mxu0 %v120
    %138 = vmatprep.subr.mxu0 0.0
    %139 = vmatpush1.msra.mxu0 %v121
    %140 = vmatprep.subr.mxu0 0.0
    %141 = vmatpush1.msra.mxu0 0.0
    %142 = vmatprep.subr.mxu0 0.0
    %143 = vmatpush1.msra.mxu0 0.0
    %144 = vmatprep.subr.mxu0 0.0
    %145 = vmatpush1.msra.mxu0 0.0
    %146 = vmatprep.subr.mxu0 0.0
    %147 = vmatpush1.msra.mxu0 0.0
    %148 = vmatprep.subr.mxu0 0.0
    %149 = vmatpush1.msra.mxu0 0.0
    %150 = vmatprep.subr.mxu0 0.0
    %151 = vmatpush1.msra.mxu0 0.0
    %152 = vmatprep.subr.mxu0 0.0
    %153 = vmatpush1.msra.mxu0 0.0
    %154 = vmatprep.subr.mxu0 0.0
    %155 = vmatpush1.msra.mxu0 0.0
    %156 = vmatprep.subr.mxu0 0.0
    %157 = vmatpush1.msra.mxu0 0.0
    %158 = vmatprep.subr.mxu0 0.0
    %159 = vmatpush1.msra.mxu0 0.0
    %160 = vmatprep.subr.mxu0 0.0
    %161 = vmatpush1.msra.mxu0 0.0
    %162 = vmatprep.subr.mxu0 0.0
    %163 = vmatpush1.msra.mxu0 0.0
    %164 = vmatprep.subr.mxu0 0.0
    %165 = vmatpush1.msra.mxu0 0.0
    %166 = vmatprep.subr.mxu0 0.0
    %167 = vmatpush1.msra.mxu0 0.0
    %168 = vmatprep.subr.mxu0 0.0
    %169 = vmatpush1.msra.mxu0 0.0
    %170 = vmatprep.subr.mxu0 0.0
    %171 = vmatpush1.msra.mxu0 0.0
    %172 = vmatprep.subr.mxu0 0.0
    %173 = vmatpush1.msra.mxu0 0.0
    %174 = vmatprep.subr.mxu0 0.0
    %175 = vmatpush1.msra.mxu0 0.0
    %176 = vmatprep.subr.mxu0 0.0
    %177 = vmatpush1.msra.mxu0 0.0
    %178 = vmatprep.subr.mxu0 0.0
    %179 = vmatpush1.msra.mxu0 0.0
    %180 = vmatprep.subr.mxu0 0.0
    %181 = vmatpush1.msra.mxu0 0.0
    %182 = vmatprep.subr.mxu0 0.0
    %183 = vmatpush1.msra.mxu0 0.0
    %184 = vmatprep.subr.mxu0 0.0
    %185 = vmatpush1.msra.mxu0 0.0
    %186 = vmatprep.subr.mxu0 0.0
    %187 = vmatpush1.msra.mxu0 0.0
    %188 = vmatprep.subr.mxu0 0.0
    %189 = vmatpush1.msra.mxu0 0.0
    %190 = vmatprep.subr.mxu0 0.0
    %191 = vmatpush1.msra.mxu0 0.0
    %192 = vmatprep.subr.mxu0 0.0
    %193 = vmatpush1.msra.mxu0 0.0
    %194 = vmatprep.subr.mxu0 0.0
    %195 = vmatpush1.msra.mxu0 0.0
    %196 = vmatprep.mubr.f32.mxu0 0.0
    %197 = vmatmul.mubr.f32.gmra.mrb[0].mxu0 %v130
    %v198 = vpop.f32.mrb[0].mxu0
    %v199 = vadd.f32 %v127, %v198
    %v200 = vpop.f32.mrb[0].mxu0
    %201 = vdwg.mxu0
    %vm202 = vcmask 58368
    %203 = vst.msk [vmem:[#allocation2] sm:$0x3] %vm202, %v199
    // Predicated region
    $region26: #{mean_encoder_forward.3} parent=1 // pred_check
      _
    $region27: #{mean_encoder_forward.3} parent=1 // pred_check_branch
      %205 = sbr.rel (0) target = $region29
    $region28: #{mean_encoder_forward.3} parent=1 // pred_region
      %s207 = ssub.s32 32, 32
      %208 = vsyncadd [#allocation3], %s207
      %s210 = sshll.u32 [#allocation2], 4
      %s211 = int_to_ptr.vmem [resolvable:$true] %s210
      %213 = dma.vmem_to_hbm [thread:$0]  %s211, 32, %s6, [#allocation3]
    $region29: #{mean_encoder_forward.3} parent=1 // pred_fallthru
      _
    // Predicated region
    $region30: #{mean_encoder_forward.3} parent=1 // pred_check
      _
    $region31: #{mean_encoder_forward.3} parent=1 // pred_check_branch
      %215 = sbr.rel (0) target = $region33
    $region32: #{mean_encoder_forward.3} parent=1 // pred_region
      %216 = dma.done [#allocation3], 32
    $region33: #{mean_encoder_forward.3} parent=1 // pred_fallthru
      _
    %217 = vsyncpa [#allocation3], 1

// kernel: mean_encoder_forward.2
$region0: #{mean_encoder_forward.2}
  #allocation0 [shape = 'u32[]', space=smem, size = 0x4, offset = 0x4, fixed_abs, tag = 'smem constant byte address 0x4 - core index']
  #allocation1 [shape = 'u32[144,128]{1,0:T(1,128)}', space=vmem, size = 0x12000, scoped, tag = 'internal scratch']
  %s0 = inlined_call_operand.vmem [shape: f32[2,4,128], index: 0, kind: input, shape index: {}]
  %s1 = inlined_call_operand.vmem [shape: f32[32,4], index: 1, kind: input, shape index: {}]
  %s2 = inlined_call_operand.vmem [shape: f32[32,1], index: 2, kind: input, shape index: {}]
  %s3 = inlined_call_operand.vmem [shape: f32[32,32], index: 3, kind: input, shape index: {}]
  %s4 = inlined_call_operand.vmem [shape: f32[32,1], index: 4, kind: input, shape index: {}]
  %s5 = inlined_call_operand.vmem [shape: f32[1,32,2], index: 5, kind: output, shape index: {}]
  %s6 = sld [smem:[#allocation0]]
  $region34: #{mean_encoder_forward.2} parent=0
    _
  %s8 = ssub.s32 1, %s6
  %s9 = scalar_select 0, %s8, %s6
  // Predicated region
  $region2: #{mean_encoder_forward.2} parent=0 // pred_check
    _
  $region3: #{mean_encoder_forward.2} parent=0 // pred_check_branch
    %11 = sbr.rel (0) target = $region5
  $region4: #{mean_encoder_forward.2} parent=0 // pred_region
    _
  $region5: #{mean_encoder_forward.2} parent=0 // pred_fallthru
    _
  // Predicated region
  $region6: #{mean_encoder_forward.2} parent=0 // pred_check
    _
  $region7: #{mean_encoder_forward.2} parent=0 // pred_check_branch
    %13 = sbr.rel (0) target = $region9
  $region8: #{mean_encoder_forward.2} parent=0 // pred_region
    _
  $region9: #{mean_encoder_forward.2} parent=0 // pred_fallthru
    _
  // Predicated region
  $region10: #{mean_encoder_forward.2} parent=0 // pred_check
    _
  $region11: #{mean_encoder_forward.2} parent=0 // pred_check_branch
    %15 = sbr.rel (0) target = $region13
  $region12: #{mean_encoder_forward.2} parent=0 // pred_region
    _
  $region13: #{mean_encoder_forward.2} parent=0 // pred_fallthru
    _
  // Predicated region
  $region14: #{mean_encoder_forward.2} parent=0 // pred_check
    _
  $region15: #{mean_encoder_forward.2} parent=0 // pred_check_branch
    %17 = sbr.rel (0) target = $region17
  $region16: #{mean_encoder_forward.2} parent=0 // pred_region
    _
  $region17: #{mean_encoder_forward.2} parent=0 // pred_fallthru
    _
  // Predicated region
  $region18: #{mean_encoder_forward.2} parent=0 // pred_check
    _
  $region19: #{mean_encoder_forward.2} parent=0 // pred_check_branch
    %19 = sbr.rel (0) target = $region21
  $region20: #{mean_encoder_forward.2} parent=0 // pred_region
    _
  $region21: #{mean_encoder_forward.2} parent=0 // pred_fallthru
    _
  %p20 = scmp.eq.s32.totalorder 0, 0
  // Predicated region
  $region22: #{mean_encoder_forward.2} parent=0 // pred_check
    %p21 = pneg %p20
  $region23: #{mean_encoder_forward.2} parent=0 // pred_check_branch
    %23 = sbr.rel (%p21) target = $region25
  $region24: #{mean_encoder_forward.2} parent=0 // pred_region
    %vm24 = vcmask 15360
    %25 = vst.msk [vmem:[%s5] sm:$0xff] %vm24, 0.0
    %26 = vst.msk [vmem:[%s5 + $0x8] sm:$0xff] %vm24, 0.0
    %27 = vst.msk [vmem:[%s5 + $0x10] sm:$0xff] %vm24, 0.0
    %28 = vst.msk [vmem:[%s5 + $0x18] sm:$0xff] %vm24, 0.0
  $region25: #{mean_encoder_forward.2} parent=0 // pred_fallthru
    _
  %v29 = vlaneseq
  %v30 = vand.u32 %v29, 127
  %s31 = smul.u32 0, 128
  %v32 = vstv %s31
  %v33 = vadd.s32 %v30, %v32
  %vm34 = vcmp.lt.s32.totalorder %v33, 16
  %v35 = vld [vmem:[%s1] sm:$0xff]
  %v36 = vld [vmem:[%s1 + $0x8] sm:$0xff]
  %v37 = vld [vmem:[%s1 + $0x10] sm:$0xff]
  %v38 = vld [vmem:[%s1 + $0x18] sm:$0xff]
  %v39 = vld [vmem:[%s2] sm:$0xff]
  %v40 = vld [vmem:[%s2 + $0x8] sm:$0xff]
  %v41 = vld [vmem:[%s2 + $0x10] sm:$0xff]
  %v42 = vld [vmem:[%s2 + $0x18] sm:$0xff]
  %v43 = vld [vmem:[%s3] sm:$0xff]
  %v44 = vld [vmem:[%s3 + $0x8] sm:$0xff]
  %v45 = vld [vmem:[%s3 + $0x10] sm:$0xff]
  %v46 = vld [vmem:[%s3 + $0x18] sm:$0xff]
  %v47 = vld [vmem:[%s4] sm:$0xff]
  %v48 = vld [vmem:[%s4 + $0x8] sm:$0xff]
  %v49 = vld [vmem:[%s4 + $0x10] sm:$0xff]
  %v50 = vld [vmem:[%s4 + $0x18] sm:$0xff]
  %v51 = vld [vmem:[%s0] sm:$0xf]
  %53 = vset.pattern.permute.xlu0 0
  %54 = vperm.xlu0 %53, %v39
  %v55 = vpop.permute.xlu0 %54
  %58 = vset.pattern.permute.xlu0 0
  %59 = vperm.xlu0 %58, %v40
  %v60 = vpop.permute.xlu0 %59
  %63 = vset.pattern.permute.xlu0 0
  %64 = vperm.xlu0 %63, %v41
  %v65 = vpop.permute.xlu0 %64
  %68 = vset.pattern.permute.xlu0 0
  %69 = vperm.xlu0 %68, %v42
  %v70 = vpop.permute.xlu0 %69
  %vm72 = vcmask 31744
  %v74 = vsel %vm72, %v35, 0
  %v77 = vsel %vm72, %v36, 0
  %v80 = vsel %vm72, %v37, 0
  %v83 = vsel %vm72, %v38, 0
  %vm85 = vcmask 1043456
  %v87 = vsel %vm85, %v51, 0
  %89 = vmatprep.subr.mxu0 0.0
  %90 = vmatpush1.msra.mxu0 %v87
  %91 = vmatprep.subr.mxu0 0.0
  %92 = vmatpush1.msra.mxu0 0.0
  %93 = vmatprep.subr.mxu0 0.0
  %94 = vmatpush1.msra.mxu0 0.0
  %95 = vmatprep.subr.mxu0 0.0
  %96 = vmatpush1.msra.mxu0 0.0
  %97 = vmatprep.subr.mxu0 0.0
  %98 = vmatpush1.msra.mxu0 0.0
  %99 = vmatprep.subr.mxu0 0.0
  %100 = vmatpush1.msra.mxu0 0.0
  %101 = vmatprep.subr.mxu0 0.0
  %102 = vmatpush1.msra.mxu0 0.0
  %103 = vmatprep.subr.mxu0 0.0
  %104 = vmatpush1.msra.mxu0 0.0
  %105 = vmatprep.subr.mxu0 0.0
  %106 = vmatpush1.msra.mxu0 0.0
  %107 = vmatprep.subr.mxu0 0.0
  %108 = vmatpush1.msra.mxu0 0.0
  %109 = vmatprep.subr.mxu0 0.0
  %110 = vmatpush1.msra.mxu0 0.0
  %111 = vmatprep.subr.mxu0 0.0
  %112 = vmatpush1.msra.mxu0 0.0
  %113 = vmatprep.subr.mxu0 0.0
  %114 = vmatpush1.msra.mxu0 0.0
  %115 = vmatprep.subr.mxu0 0.0
  %116 = vmatpush1.msra.mxu0 0.0
  %117 = vmatprep.subr.mxu0 0.0
  %118 = vmatpush1.msra.mxu0 0.0
  %119 = vmatprep.subr.mxu0 0.0
  %120 = vmatpush1.msra.mxu0 0.0
  %121 = vmatprep.subr.mxu0 0.0
  %122 = vmatpush1.msra.mxu0 0.0
  %123 = vmatprep.subr.mxu0 0.0
  %124 = vmatpush1.msra.mxu0 0.0
  %125 = vmatprep.subr.mxu0 0.0
  %126 = vmatpush1.msra.mxu0 0.0
  %127 = vmatprep.subr.mxu0 0.0
  %128 = vmatpush1.msra.mxu0 0.0
  %129 = vmatprep.subr.mxu0 0.0
  %130 = vmatpush1.msra.mxu0 0.0
  %131 = vmatprep.subr.mxu0 0.0
  %132 = vmatpush1.msra.mxu0 0.0
  %133 = vmatprep.subr.mxu0 0.0
  %134 = vmatpush1.msra.mxu0 0.0
  %135 = vmatprep.subr.mxu0 0.0
  %136 = vmatpush1.msra.mxu0 0.0
  %137 = vmatprep.subr.mxu0 0.0
  %138 = vmatpush1.msra.mxu0 0.0
  %139 = vmatprep.subr.mxu0 0.0
  %140 = vmatpush1.msra.mxu0 0.0
  %141 = vmatprep.subr.mxu0 0.0
  %142 = vmatpush1.msra.mxu0 0.0
  %143 = vmatprep.subr.mxu0 0.0
  %144 = vmatpush1.msra.mxu0 0.0
  %145 = vmatprep.subr.mxu0 0.0
  %146 = vmatpush1.msra.mxu0 0.0
  %147 = vmatprep.subr.mxu0 0.0
  %148 = vmatpush1.msra.mxu0 0.0
  %149 = vmatprep.subr.mxu0 0.0
  %150 = vmatpush1.msra.mxu0 0.0
  %151 = vmatprep.subr.mxu0 0.0
  %152 = vmatpush1.msra.mxu0 0.0
  %153 = vmatprep.mubr.f32.mxu0 0.0
  %154 = vmatmul.mubr.f32.gmra.mrb[0].mxu0 %v74
  %v155 = vpop.f32.mrb[0].mxu0
  %v156 = vadd.f32 %v55, %v155
  %v157 = vpop.f32.mrb[0].mxu0
  %158 = vmatprep.mubr.f32.mxu0 0.0
  %159 = vmatmul.mubr.f32.gmra.mrb[0].mxu0 %v77
  %v160 = vpop.f32.mrb[0].mxu0
  %v161 = vadd.f32 %v60, %v160
  %v162 = vpop.f32.mrb[0].mxu0
  %163 = vmatprep.mubr.f32.mxu0 0.0
  %164 = vmatmul.mubr.f32.gmra.mrb[0].mxu0 %v80
  %v165 = vpop.f32.mrb[0].mxu0
  %v166 = vadd.f32 %v65, %v165
  %v167 = vpop.f32.mrb[0].mxu0
  %168 = vmatprep.mubr.f32.mxu0 0.0
  %169 = vmatmul.mubr.f32.gmra.mrb[0].mxu0 %v83
  %v170 = vpop.f32.mrb[0].mxu0
  %v171 = vadd.f32 %v70, %v170
  %v172 = vpop.f32.mrb[0].mxu0
  %173 = vdwg.mxu0
  %v174 = vmax.f32 %v156, 0.0
  %v175 = vmax.f32 %v161, 0.0
  %v176 = vmax.f32 %v166, 0.0
  %v177 = vmax.f32 %v171, 0.0
  %179 = vset.pattern.permute.xlu0 0
  %180 = vperm.xlu0 %179, %v47
  %v181 = vpop.permute.xlu0 %180
  %184 = vset.pattern.permute.xlu0 0
  %185 = vperm.xlu0 %184, %v48
  %v186 = vpop.permute.xlu0 %185
  %189 = vset.pattern.permute.xlu0 0
  %190 = vperm.xlu0 %189, %v49
  %v191 = vpop.permute.xlu0 %190
  %194 = vset.pattern.permute.xlu0 0
  %195 = vperm.xlu0 %194, %v50
  %v196 = vpop.permute.xlu0 %195
  %vm198 = vcmask 261120
  %v200 = vsel %vm198, %v43, 0
  %v203 = vsel %vm198, %v44, 0
  %v206 = vsel %vm198, %v45, 0
  %v209 = vsel %vm198, %v46, 0
  %211 = vmatprep.subr.mxu0 0.0
  %212 = vmatpush1.msra.mxu0 %v174
  %213 = vmatprep.subr.mxu0 0.0
  %214 = vmatpush1.msra.mxu0 %v175
  %215 = vmatprep.subr.mxu0 0.0
  %216 = vmatpush1.msra.mxu0 %v176
  %217 = vmatprep.subr.mxu0 0.0
  %218 = vmatpush1.msra.mxu0 %v177
  %219 = vmatprep.subr.mxu0 0.0
  %220 = vmatpush1.msra.mxu0 0.0
  %221 = vmatprep.subr.mxu0 0.0
  %222 = vmatpush1.msra.mxu0 0.0
  %223 = vmatprep.subr.mxu0 0.0
  %224 = vmatpush1.msra.mxu0 0.0
  %225 = vmatprep.subr.mxu0 0.0
  %226 = vmatpush1.msra.mxu0 0.0
  %227 = vmatprep.subr.mxu0 0.0
  %228 = vmatpush1.msra.mxu0 0.0
  %229 = vmatprep.subr.mxu0 0.0
  %230 = vmatpush1.msra.mxu0 0.0
  %231 = vmatprep.subr.mxu0 0.0
  %232 = vmatpush1.msra.mxu0 0.0
  %233 = vmatprep.subr.mxu0 0.0
  %234 = vmatpush1.msra.mxu0 0.0
  %235 = vmatprep.subr.mxu0 0.0
  %236 = vmatpush1.msra.mxu0 0.0
  %237 = vmatprep.subr.mxu0 0.0
  %238 = vmatpush1.msra.mxu0 0.0
  %239 = vmatprep.subr.mxu0 0.0
  %240 = vmatpush1.msra.mxu0 0.0
  %241 = vmatprep.subr.mxu0 0.0
  %242 = vmatpush1.msra.mxu0 0.0
  %243 = vmatprep.subr.mxu0 0.0
  %244 = vmatpush1.msra.mxu0 0.0
  %245 = vmatprep.subr.mxu0 0.0
  %246 = vmatpush1.msra.mxu0 0.0
  %247 = vmatprep.subr.mxu0 0.0
  %248 = vmatpush1.msra.mxu0 0.0
  %249 = vmatprep.subr.mxu0 0.0
  %250 = vmatpush1.msra.mxu0 0.0
  %251 = vmatprep.subr.mxu0 0.0
  %252 = vmatpush1.msra.mxu0 0.0
  %253 = vmatprep.subr.mxu0 0.0
  %254 = vmatpush1.msra.mxu0 0.0
  %255 = vmatprep.subr.mxu0 0.0
  %256 = vmatpush1.msra.mxu0 0.0
  %257 = vmatprep.subr.mxu0 0.0
  %258 = vmatpush1.msra.mxu0 0.0
  %259 = vmatprep.subr.mxu0 0.0
  %260 = vmatpush1.msra.mxu0 0.0
  %261 = vmatprep.subr.mxu0 0.0
  %262 = vmatpush1.msra.mxu0 0.0
  %263 = vmatprep.subr.mxu0 0.0
  %264 = vmatpush1.msra.mxu0 0.0
  %265 = vmatprep.subr.mxu0 0.0
  %266 = vmatpush1.msra.mxu0 0.0
  %267 = vmatprep.subr.mxu0 0.0
  %268 = vmatpush1.msra.mxu0 0.0
  %269 = vmatprep.subr.mxu0 0.0
  %270 = vmatpush1.msra.mxu0 0.0
  %271 = vmatprep.subr.mxu0 0.0
  %272 = vmatpush1.msra.mxu0 0.0
  %273 = vmatprep.subr.mxu0 0.0
  %274 = vmatpush1.msra.mxu0 0.0
  %275 = vmatprep.mubr.f32.mxu0 0.0
  %276 = vmatmul.mubr.f32.gmra.mrb[0].mxu0 %v200
  %v277 = vpop.f32.mrb[0].mxu0
  %v278 = vadd.f32 %v181, %v277
  %v279 = vpop.f32.mrb[0].mxu0
  %280 = vmatprep.mubr.f32.mxu0 0.0
  %281 = vmatmul.mubr.f32.gmra.mrb[0].mxu0 %v203
  %v282 = vpop.f32.mrb[0].mxu0
  %v283 = vadd.f32 %v186, %v282
  %v284 = vpop.f32.mrb[0].mxu0
  %285 = vmatprep.mubr.f32.mxu0 0.0
  %286 = vmatmul.mubr.f32.gmra.mrb[0].mxu0 %v206
  %v287 = vpop.f32.mrb[0].mxu0
  %v288 = vadd.f32 %v191, %v287
  %v289 = vpop.f32.mrb[0].mxu0
  %290 = vmatprep.mubr.f32.mxu0 0.0
  %291 = vmatmul.mubr.f32.gmra.mrb[0].mxu0 %v209
  %v292 = vpop.f32.mrb[0].mxu0
  %v293 = vadd.f32 %v196, %v292
  %v294 = vpop.f32.mrb[0].mxu0
  %295 = vdwg.mxu0
  %v296 = vsel %vm34, 1, 0
  %vm297 = vcmp.eq.s32.totalorder %v296, 1
  %v298 = vsel %vm297, %v278, 0.0
  %v299 = vsel %vm297, %v283, 0.0
  %v300 = vsel %vm297, %v288, 0.0
  %v301 = vsel %vm297, %v293, 0.0
  %v302 = vld [vmem:[%s5] sm:$0xff]
  %v303 = vld [vmem:[%s5 + $0x8] sm:$0xff]
  %v304 = vld [vmem:[%s5 + $0x10] sm:$0xff]
  %v305 = vld [vmem:[%s5 + $0x18] sm:$0xff]
  %306 = vadd.xlane.f32.xlu0 %v298
  %v307 = vpop.xlane.xlu0 %306
  %308 = vadd.xlane.f32.xlu0 %v299
  %v309 = vpop.xlane.xlu0 %308
  %310 = vadd.xlane.f32.xlu0 %v300
  %v311 = vpop.xlane.xlu0 %310
  %312 = vadd.xlane.f32.xlu0 %v301
  %v313 = vpop.xlane.xlu0 %312
  %v314 = vadd.f32 %v302, %v307
  %v315 = vadd.f32 %v303, %v309
  %v316 = vadd.f32 %v304, %v311
  %v317 = vadd.f32 %v305, %v313
  %vm318 = vcmask 7168
  %319 = vst.msk [vmem:[%s5] sm:$0xff] %vm318, %v314
  %320 = vst.msk [vmem:[%s5 + $0x8] sm:$0xff] %vm318, %v315
  %321 = vst.msk [vmem:[%s5 + $0x10] sm:$0xff] %vm318, %v316
  %322 = vst.msk [vmem:[%s5 + $0x18] sm:$0xff] %vm318, %v317
  %s323 = scalar_lea.vmem %s0, 4
  %v324 = vld [vmem:[%s323] sm:$0xf]
  %v326 = vsel %vm85, %v324, 0
  %328 = vmatprep.subr.mxu0 0.0
  %329 = vmatpush1.msra.mxu0 %v326
  %330 = vmatprep.subr.mxu0 0.0
  %331 = vmatpush1.msra.mxu0 0.0
  %332 = vmatprep.subr.mxu0 0.0
  %333 = vmatpush1.msra.mxu0 0.0
  %334 = vmatprep.subr.mxu0 0.0
  %335 = vmatpush1.msra.mxu0 0.0
  %336 = vmatprep.subr.mxu0 0.0
  %337 = vmatpush1.msra.mxu0 0.0
  %338 = vmatprep.subr.mxu0 0.0
  %339 = vmatpush1.msra.mxu0 0.0
  %340 = vmatprep.subr.mxu0 0.0
  %341 = vmatpush1.msra.mxu0 0.0
  %342 = vmatprep.subr.mxu0 0.0
  %343 = vmatpush1.msra.mxu0 0.0
  %344 = vmatprep.subr.mxu0 0.0
  %345 = vmatpush1.msra.mxu0 0.0
  %346 = vmatprep.subr.mxu0 0.0
  %347 = vmatpush1.msra.mxu0 0.0
  %348 = vmatprep.subr.mxu0 0.0
  %349 = vmatpush1.msra.mxu0 0.0
  %350 = vmatprep.subr.mxu0 0.0
  %351 = vmatpush1.msra.mxu0 0.0
  %352 = vmatprep.subr.mxu0 0.0
  %353 = vmatpush1.msra.mxu0 0.0
  %354 = vmatprep.subr.mxu0 0.0
  %355 = vmatpush1.msra.mxu0 0.0
  %356 = vmatprep.subr.mxu0 0.0
  %357 = vmatpush1.msra.mxu0 0.0
  %358 = vmatprep.subr.mxu0 0.0
  %359 = vmatpush1.msra.mxu0 0.0
  %360 = vmatprep.subr.mxu0 0.0
  %361 = vmatpush1.msra.mxu0 0.0
  %362 = vmatprep.subr.mxu0 0.0
  %363 = vmatpush1.msra.mxu0 0.0
  %364 = vmatprep.subr.mxu0 0.0
  %365 = vmatpush1.msra.mxu0 0.0
  %366 = vmatprep.subr.mxu0 0.0
  %367 = vmatpush1.msra.mxu0 0.0
  %368 = vmatprep.subr.mxu0 0.0
  %369 = vmatpush1.msra.mxu0 0.0
  %370 = vmatprep.subr.mxu0 0.0
  %371 = vmatpush1.msra.mxu0 0.0
  %372 = vmatprep.subr.mxu0 0.0
  %373 = vmatpush1.msra.mxu0 0.0
  %374 = vmatprep.subr.mxu0 0.0
  %375 = vmatpush1.msra.mxu0 0.0
  %376 = vmatprep.subr.mxu0 0.0
  %377 = vmatpush1.msra.mxu0 0.0
  %378 = vmatprep.subr.mxu0 0.0
  %379 = vmatpush1.msra.mxu0 0.0
  %380 = vmatprep.subr.mxu0 0.0
  %381 = vmatpush1.msra.mxu0 0.0
  %382 = vmatprep.subr.mxu0 0.0
  %383 = vmatpush1.msra.mxu0 0.0
  %384 = vmatprep.subr.mxu0 0.0
  %385 = vmatpush1.msra.mxu0 0.0
  %386 = vmatprep.subr.mxu0 0.0
  %387 = vmatpush1.msra.mxu0 0.0
  %388 = vmatprep.subr.mxu0 0.0
  %389 = vmatpush1.msra.mxu0 0.0
  %390 = vmatprep.subr.mxu0 0.0
  %391 = vmatpush1.msra.mxu0 0.0
  %392 = vmatprep.mubr.f32.mxu0 0.0
  %393 = vmatmul.mubr.f32.gmra.mrb[0].mxu0 %v74
  %v394 = vpop.f32.mrb[0].mxu0
  %v395 = vadd.f32 %v55, %v394
  %v396 = vpop.f32.mrb[0].mxu0
  %397 = vmatprep.mubr.f32.mxu0 0.0
  %398 = vmatmul.mubr.f32.gmra.mrb[0].mxu0 %v77
  %v399 = vpop.f32.mrb[0].mxu0
  %v400 = vadd.f32 %v60, %v399
  %v401 = vpop.f32.mrb[0].mxu0
  %402 = vmatprep.mubr.f32.mxu0 0.0
  %403 = vmatmul.mubr.f32.gmra.mrb[0].mxu0 %v80
  %v404 = vpop.f32.mrb[0].mxu0
  %v405 = vadd.f32 %v65, %v404
  %v406 = vpop.f32.mrb[0].mxu0
  %407 = vmatprep.mubr.f32.mxu0 0.0
  %408 = vmatmul.mubr.f32.gmra.mrb[0].mxu0 %v83
  %v409 = vpop.f32.mrb[0].mxu0
  %v410 = vadd.f32 %v70, %v409
  %v411 = vpop.f32.mrb[0].mxu0
  %412 = vdwg.mxu0
  %v413 = vmax.f32 %v395, 0.0
  %v414 = vmax.f32 %v400, 0.0
  %v415 = vmax.f32 %v405, 0.0
  %v416 = vmax.f32 %v410, 0.0
  %417 = vmatprep.subr.mxu0 0.0
  %418 = vmatpush1.msra.mxu0 %v413
  %419 = vmatprep.subr.mxu0 0.0
  %420 = vmatpush1.msra.mxu0 %v414
  %421 = vmatprep.subr.mxu0 0.0
  %422 = vmatpush1.msra.mxu0 %v415
  %423 = vmatprep.subr.mxu0 0.0
  %424 = vmatpush1.msra.mxu0 %v416
  %425 = vmatprep.subr.mxu0 0.0
  %426 = vmatpush1.msra.mxu0 0.0
  %427 = vmatprep.subr.mxu0 0.0
  %428 = vmatpush1.msra.mxu0 0.0
  %429 = vmatprep.subr.mxu0 0.0
  %430 = vmatpush1.msra.mxu0 0.0
  %431 = vmatprep.subr.mxu0 0.0
  %432 = vmatpush1.msra.mxu0 0.0
  %433 = vmatprep.subr.mxu0 0.0
  %434 = vmatpush1.msra.mxu0 0.0
  %435 = vmatprep.subr.mxu0 0.0
  %436 = vmatpush1.msra.mxu0 0.0
  %437 = vmatprep.subr.mxu0 0.0
  %438 = vmatpush1.msra.mxu0 0.0
  %439 = vmatprep.subr.mxu0 0.0
  %440 = vmatpush1.msra.mxu0 0.0
  %441 = vmatprep.subr.mxu0 0.0
  %442 = vmatpush1.msra.mxu0 0.0
  %443 = vmatprep.subr.mxu0 0.0
  %444 = vmatpush1.msra.mxu0 0.0
  %445 = vmatprep.subr.mxu0 0.0
  %446 = vmatpush1.msra.mxu0 0.0
  %447 = vmatprep.subr.mxu0 0.0
  %448 = vmatpush1.msra.mxu0 0.0
  %449 = vmatprep.subr.mxu0 0.0
  %450 = vmatpush1.msra.mxu0 0.0
  %451 = vmatprep.subr.mxu0 0.0
  %452 = vmatpush1.msra.mxu0 0.0
  %453 = vmatprep.subr.mxu0 0.0
  %454 = vmatpush1.msra.mxu0 0.0
  %455 = vmatprep.subr.mxu0 0.0
  %456 = vmatpush1.msra.mxu0 0.0
  %457 = vmatprep.subr.mxu0 0.0
  %458 = vmatpush1.msra.mxu0 0.0
  %459 = vmatprep.subr.mxu0 0.0
  %460 = vmatpush1.msra.mxu0 0.0
  %461 = vmatprep.subr.mxu0 0.0
  %462 = vmatpush1.msra.mxu0 0.0
  %463 = vmatprep.subr.mxu0 0.0
  %464 = vmatpush1.msra.mxu0 0.0
  %465 = vmatprep.subr.mxu0 0.0
  %466 = vmatpush1.msra.mxu0 0.0
  %467 = vmatprep.subr.mxu0 0.0
  %468 = vmatpush1.msra.mxu0 0.0
  %469 = vmatprep.subr.mxu0 0.0
  %470 = vmatpush1.msra.mxu0 0.0
  %471 = vmatprep.subr.mxu0 0.0
  %472 = vmatpush1.msra.mxu0 0.0
  %473 = vmatprep.subr.mxu0 0.0
  %474 = vmatpush1.msra.mxu0 0.0
  %475 = vmatprep.subr.mxu0 0.0
  %476 = vmatpush1.msra.mxu0 0.0
  %477 = vmatprep.subr.mxu0 0.0
  %478 = vmatpush1.msra.mxu0 0.0
  %479 = vmatprep.subr.mxu0 0.0
  %480 = vmatpush1.msra.mxu0 0.0
  %481 = vmatprep.mubr.f32.mxu0 0.0
  %482 = vmatmul.mubr.f32.gmra.mrb[0].mxu0 %v200
  %v483 = vpop.f32.mrb[0].mxu0
  %v484 = vadd.f32 %v181, %v483
  %v485 = vpop.f32.mrb[0].mxu0
  %486 = vmatprep.mubr.f32.mxu0 0.0
  %487 = vmatmul.mubr.f32.gmra.mrb[0].mxu0 %v203
  %v488 = vpop.f32.mrb[0].mxu0
  %v489 = vadd.f32 %v186, %v488
  %v490 = vpop.f32.mrb[0].mxu0
  %491 = vmatprep.mubr.f32.mxu0 0.0
  %492 = vmatmul.mubr.f32.gmra.mrb[0].mxu0 %v206
  %v493 = vpop.f32.mrb[0].mxu0
  %v494 = vadd.f32 %v191, %v493
  %v495 = vpop.f32.mrb[0].mxu0
  %496 = vmatprep.mubr.f32.mxu0 0.0
  %497 = vmatmul.mubr.f32.gmra.mrb[0].mxu0 %v209
  %v498 = vpop.f32.mrb[0].mxu0
  %v499 = vadd.f32 %v196, %v498
  %v500 = vpop.f32.mrb[0].mxu0
  %501 = vdwg.mxu0
  %v502 = vsel %vm297, %v484, 0.0
  %v503 = vsel %vm297, %v489, 0.0
  %v504 = vsel %vm297, %v494, 0.0
  %v505 = vsel %vm297, %v499, 0.0
  %v506 = vld [vmem:[%s5] sm:$0xff]
  %v507 = vld [vmem:[%s5 + $0x8] sm:$0xff]
  %v508 = vld [vmem:[%s5 + $0x10] sm:$0xff]
  %v509 = vld [vmem:[%s5 + $0x18] sm:$0xff]
  %510 = vadd.xlane.f32.xlu0 %v502
  %v511 = vpop.xlane.xlu0 %510
  %512 = vadd.xlane.f32.xlu0 %v503
  %v513 = vpop.xlane.xlu0 %512
  %514 = vadd.xlane.f32.xlu0 %v504
  %v515 = vpop.xlane.xlu0 %514
  %516 = vadd.xlane.f32.xlu0 %v505
  %v517 = vpop.xlane.xlu0 %516
  %v518 = vadd.f32 %v506, %v511
  %v519 = vadd.f32 %v507, %v513
  %v520 = vadd.f32 %v508, %v515
  %v521 = vadd.f32 %v509, %v517
  %vm522 = vcmask 15368
  %523 = vst.msk [vmem:[%s5] sm:$0xff] %vm522, %v518
  %524 = vst.msk [vmem:[%s5 + $0x8] sm:$0xff] %vm522, %v519
  %525 = vst.msk [vmem:[%s5 + $0x10] sm:$0xff] %vm522, %v520
  %526 = vst.msk [vmem:[%s5 + $0x18] sm:$0xff] %vm522, %v521
  // Predicated region
  $region26: #{mean_encoder_forward.2} parent=0 // pred_check
    _
  $region27: #{mean_encoder_forward.2} parent=0 // pred_check_branch
    %528 = sbr.rel (0) target = $region29
  $region28: #{mean_encoder_forward.2} parent=0 // pred_region
    _
  $region29: #{mean_encoder_forward.2} parent=0 // pred_fallthru
    _
  // Predicated region
  $region30: #{mean_encoder_forward.2} parent=0 // pred_check
    _
  $region31: #{mean_encoder_forward.2} parent=0 // pred_check_branch
    %530 = sbr.rel (0) target = $region33
  $region32: #{mean_encoder_forward.2} parent=0 // pred_region
    _
  $region33: #{mean_encoder_forward.2} parent=0 // pred_fallthru
    _

</llo_original>
